<compile_context>
chip_gen: v5e
topology: v5e:2x2
jax: 0.10.0
libtpu: 0.0.40
codegen_flags: <defaults>
</compile_context>

<pallas_src>
import functools
import math

import jax
import jax.numpy as jnp
from jax.experimental import pallas as pl
from jax.experimental.pallas import tpu as pltpu

LANE = 128


def _round_up(x, m):
    return ((x + m - 1) // m) * m


def mlp5_kernel(x_ref, w1_ref, b1_ref, wh_ref, bh_ref, w5_ref, b5_ref, o_ref,
                *, out_dim):
    """One batch tile of the 5-layer MLP. All weights are VMEM-resident across steps."""
    h = x_ref[...]                                                      # (bm, in_dim) f32
    # Layer 1: Linear + ReLU (padded hidden lanes stay exactly 0: relu(0*x + 0) = 0).
    h = jnp.maximum(
        jnp.dot(h, w1_ref[...], preferred_element_type=jnp.float32) + b1_ref[...], 0.0)
    # Layers 2..4: stacked resident weights, static index -> unrolled.
    for j in range(3):
        h = jnp.maximum(
            jnp.dot(h, wh_ref[j], preferred_element_type=jnp.float32) + bh_ref[j], 0.0)
    # Layer 5: lane-dense matmul into the padded output width, then keep only the real
    # output column(s) so the HBM store is (bm, out_dim) instead of a 128-lane slab.
    z5 = jnp.dot(h, w5_ref[...], preferred_element_type=jnp.float32) + b5_ref[...]
    z = z5[:, :out_dim]
    # Exact sigmoid (exp rides the EUP slot; one VPU divide) -- matches jax.nn.sigmoid.
    o_ref[...] = (1.0 / (1.0 + jnp.exp(-z))).astype(o_ref.dtype)


def neural_network5_forward(x, params, *, block_m=2048):
    """x: [batch, input_dim] f32. params: flat list [w1,b1,...,w5,b5], W stored as [in, out]."""
    batch, in_dim = x.shape
    hid_dim = params[0].shape[-1]
    out_dim = params[-1].shape[-1]

    h_pad = _round_up(hid_dim, LANE)
    o_pad = _round_up(out_dim, LANE)

    w1, b1, w2, b2, w3, b3, w4, b4, w5, b5 = params

    def pad2(a, rows, cols):
        return jnp.pad(a, ((0, rows - a.shape[0]), (0, cols - a.shape[1])))

    w1p = pad2(w1, in_dim, h_pad)                                       # (in_dim, 128)
    b1p = pad2(b1, 1, h_pad)                                            # (1, 128)
    whp = jnp.stack([pad2(w, h_pad, h_pad) for w in (w2, w3, w4)])      # (3, 128, 128)
    bhp = jnp.stack([pad2(b, 1, h_pad) for b in (b2, b3, b4)])          # (3, 1, 128)
    w5p = pad2(w5, h_pad, o_pad)                                        # (128, 128)
    b5p = pad2(b5, 1, o_pad)                                            # (1, 128)

    # Batch tiling: big tiles amortize per-step overhead; keep >= 2 grid steps when the
    # batch allows so v7x's second TensorCore is used (neutral on v5e/v6e).
    bm = min(block_m, _round_up(batch, 8))
    if batch >= 16 and _round_up(batch, bm) // bm < 2:
        bm = _round_up((batch + 1) // 2, 8)
    padded_batch = _round_up(batch, bm)
    xp = jnp.pad(x, ((0, padded_batch - batch), (0, 0)))
    grid = (padded_batch // bm,)

    resident2 = lambda i: (0, 0)
    resident3 = lambda i: (0, 0, 0)
    in_specs = [
        pl.BlockSpec((bm, in_dim), lambda i: (i, 0)),      # x moves with the grid
        pl.BlockSpec((in_dim, h_pad), resident2),          # w1 (resident)
        pl.BlockSpec((1, h_pad), resident2),               # b1
        pl.BlockSpec((3, h_pad, h_pad), resident3),        # stacked w2..w4
        pl.BlockSpec((3, 1, h_pad), resident3),            # stacked b2..b4
        pl.BlockSpec((h_pad, o_pad), resident2),           # w5
        pl.BlockSpec((1, o_pad), resident2),               # b5
    ]
    # Minimal-byte output: only the real out_dim column(s) are written back to HBM.
    out_specs = pl.BlockSpec((bm, out_dim), lambda i: (i, 0))

    kernel = functools.partial(mlp5_kernel, out_dim=out_dim)

    out_padded = pl.pallas_call(
        kernel,
        out_shape=jax.ShapeDtypeStruct((padded_batch, out_dim), jnp.float32),
        grid=grid,
        in_specs=in_specs,
        out_specs=out_specs,
        compiler_params=pltpu.CompilerParams(
            dimension_semantics=("parallel",),      # shard batch across TCs on v7x
            vmem_limit_bytes=32 * 1024 * 1024,      # safe on v7x's 64 MiB physical VMEM
        ),
    )(xp, w1p, b1p, whp, bhp, w5p, b5p)

    # Slice off the padded batch rows (pure layout plumbing in the wrapper).
    return out_padded[:batch, :]


def init_params(key, input_dim, hidden_dim, output_dim):
    """Deterministic init mirroring the PyTorch module.

    layer_1 uses kaiming_uniform_ (relu gain); others use PyTorch's default Linear init
    U(-1/sqrt(fan_in), 1/sqrt(fan_in)). Weights stored as [in, out] for x @ W.
    """
    dims = [(input_dim, hidden_dim),
            (hidden_dim, hidden_dim),
            (hidden_dim, hidden_dim),
            (hidden_dim, hidden_dim),
            (hidden_dim, output_dim)]
    params = []
    keys = jax.random.split(key, 2 * len(dims))
    for i, (fan_in, fan_out) in enumerate(dims):
        wk, bk = keys[2 * i], keys[2 * i + 1]
        bound_w = math.sqrt(6.0 / fan_in) if i == 0 else 1.0 / math.sqrt(fan_in)
        w = jax.random.uniform(wk, (fan_in, fan_out), jnp.float32,
                               minval=-bound_w, maxval=bound_w)
        bound_b = 1.0 / math.sqrt(fan_in)
        b = jax.random.uniform(bk, (1, fan_out), jnp.float32,
                               minval=-bound_b, maxval=bound_b)
        params += [w, b]
    return params


def reference_forward(x, params):
    """Pure-JAX reference for correctness check."""
    h = x
    for i in range(4):
        w, b = params[2 * i], params[2 * i + 1]
        h = jnp.maximum(h @ w + b, 0.0)
    w, b = params[8], params[9]
    return jax.nn.sigmoid(h @ w + b)


if __name__ == "__main__":
    input_dim = 4
    hidden_dim = 32
    output_dim = 1

    key = jax.random.PRNGKey(0)
    pkey, xkey1, xkey2 = jax.random.split(key, 3)
    params = init_params(pkey, input_dim, hidden_dim, output_dim)

    fwd = jax.jit(neural_network5_forward, static_argnames=("block_m",))

    TOL = 1e-3

    # Small batch (single grid step).
    x_small = jax.random.normal(xkey1, (8, input_dim), jnp.float32)
    out_small = jax.block_until_ready(fwd(x_small, params))
    ref_small = reference_forward(x_small, params)
    assert out_small.shape == (8, output_dim)
    assert jnp.allclose(out_small, ref_small, atol=TOL, rtol=TOL), "mismatch (small batch)"

    # Larger ragged batch exercising the batch grid (2 tiles, padded rows sliced off).
    x_big = jax.random.normal(xkey2, (1000, input_dim), jnp.float32)
    out_big = jax.block_until_ready(fwd(x_big, params))
    ref_big = reference_forward(x_big, params)
    assert out_big.shape == (1000, output_dim)
    assert jnp.allclose(out_big, ref_big, atol=TOL, rtol=TOL), "mismatch (large batch)"

    print("KERNEL_OK")
</pallas_src>

<mosaic_0001>
module attributes {stable_mosaic.version = 11 : i64} {
  func.func @mlp5_kernel(%arg0: i32, %arg1: memref<8x4xf32, #tpu.memory_space<vmem>>, %arg2: memref<4x128xf32, #tpu.memory_space<vmem>>, %arg3: memref<1x128xf32, #tpu.memory_space<vmem>>, %arg4: memref<3x128x128xf32, #tpu.memory_space<vmem>>, %arg5: memref<3x1x128xf32, #tpu.memory_space<vmem>>, %arg6: memref<128x128xf32, #tpu.memory_space<vmem>>, %arg7: memref<1x128xf32, #tpu.memory_space<vmem>>, %arg8: memref<8x1xf32, #tpu.memory_space<vmem>>) attributes {dimension_semantics = [#tpu.dimension_semantics<parallel>], iteration_bounds = array<i64: 1>, scalar_prefetch = 0 : i64, scratch_operands = 0 : i64, tpu.core_type = #tpu.core_type<tc>, window_params = [{transform_indices = @transform_0, window_bounds = array<i64: 8, 4>}, {pipeline_mode = #tpu.pipeline_mode<synchronous>, transform_indices = @transform_1, window_bounds = array<i64: 4, 128>}, {pipeline_mode = #tpu.pipeline_mode<synchronous>, transform_indices = @transform_2, window_bounds = array<i64: 1, 128>}, {pipeline_mode = #tpu.pipeline_mode<synchronous>, transform_indices = @transform_3, window_bounds = array<i64: 3, 128, 128>}, {pipeline_mode = #tpu.pipeline_mode<synchronous>, transform_indices = @transform_4, window_bounds = array<i64: 3, 1, 128>}, {pipeline_mode = #tpu.pipeline_mode<synchronous>, transform_indices = @transform_5, window_bounds = array<i64: 128, 128>}, {pipeline_mode = #tpu.pipeline_mode<synchronous>, transform_indices = @transform_6, window_bounds = array<i64: 1, 128>}, {transform_indices = @transform_7, window_bounds = array<i64: 8, 1>}]} {
    %c0 = arith.constant 0 : index
    %c0_0 = arith.constant 0 : index
    %0 = vector.load %arg1[%c0, %c0_0] : memref<8x4xf32, #tpu.memory_space<vmem>>, vector<8x4xf32>
    %c0_1 = arith.constant 0 : index
    %c0_2 = arith.constant 0 : index
    %1 = vector.load %arg2[%c0_1, %c0_2] : memref<4x128xf32, #tpu.memory_space<vmem>>, vector<4x128xf32>
    %cst = arith.constant dense<0.000000e+00> : vector<8x128xf32>
    %2 = tpu.matmul %0, %1, %cst {dimension_numbers = #tpu.dot_dimension_numbers<[1], [0], [0], [1], [0, 0, 1, 1], [], []>} : vector<8x4xf32>, vector<4x128xf32>, vector<8x128xf32> -> vector<8x128xf32>
    %c0_3 = arith.constant 0 : index
    %c0_4 = arith.constant 0 : index
    %3 = vector.load %arg3[%c0_3, %c0_4] : memref<1x128xf32, #tpu.memory_space<vmem>>, vector<1x128xf32>
    %4 = vector.broadcast %3 : vector<1x128xf32> to vector<8x128xf32>
    %5 = arith.addf %2, %4 : vector<8x128xf32>
    %cst_5 = arith.constant 0.000000e+00 : f32
    %6 = vector.broadcast %cst_5 : f32 to vector<8x128xf32>
    %7 = arith.maximumf %5, %6 : vector<8x128xf32>
    %c0_6 = arith.constant 0 : index
    %c0_7 = arith.constant 0 : index
    %c0_8 = arith.constant 0 : index
    %8 = vector.load %arg4[%c0_6, %c0_7, %c0_8] : memref<3x128x128xf32, #tpu.memory_space<vmem>>, vector<1x128x128xf32>
    %9 = vector.shape_cast %8 : vector<1x128x128xf32> to vector<128x128xf32>
    %cst_9 = arith.constant dense<0.000000e+00> : vector<8x128xf32>
    %10 = tpu.matmul %7, %9, %cst_9 {dimension_numbers = #tpu.dot_dimension_numbers<[1], [0], [0], [1], [0, 0, 1, 1], [], []>} : vector<8x128xf32>, vector<128x128xf32>, vector<8x128xf32> -> vector<8x128xf32>
    %c0_10 = arith.constant 0 : index
    %c0_11 = arith.constant 0 : index
    %c0_12 = arith.constant 0 : index
    %11 = vector.load %arg5[%c0_10, %c0_11, %c0_12] : memref<3x1x128xf32, #tpu.memory_space<vmem>>, vector<1x1x128xf32>
    %12 = vector.shape_cast %11 : vector<1x1x128xf32> to vector<1x128xf32>
    %13 = vector.broadcast %12 : vector<1x128xf32> to vector<8x128xf32>
    %14 = arith.addf %10, %13 : vector<8x128xf32>
    %cst_13 = arith.constant 0.000000e+00 : f32
    %15 = vector.broadcast %cst_13 : f32 to vector<8x128xf32>
    %16 = arith.maximumf %14, %15 : vector<8x128xf32>
    %c1 = arith.constant 1 : index
    %c0_14 = arith.constant 0 : index
    %c0_15 = arith.constant 0 : index
    %17 = vector.load %arg4[%c1, %c0_14, %c0_15] : memref<3x128x128xf32, #tpu.memory_space<vmem>>, vector<1x128x128xf32>
    %18 = vector.shape_cast %17 : vector<1x128x128xf32> to vector<128x128xf32>
    %cst_16 = arith.constant dense<0.000000e+00> : vector<8x128xf32>
    %19 = tpu.matmul %16, %18, %cst_16 {dimension_numbers = #tpu.dot_dimension_numbers<[1], [0], [0], [1], [0, 0, 1, 1], [], []>} : vector<8x128xf32>, vector<128x128xf32>, vector<8x128xf32> -> vector<8x128xf32>
    %c1_17 = arith.constant 1 : index
    %c0_18 = arith.constant 0 : index
    %c0_19 = arith.constant 0 : index
    %20 = vector.load %arg5[%c1_17, %c0_18, %c0_19] : memref<3x1x128xf32, #tpu.memory_space<vmem>>, vector<1x1x128xf32>
    %21 = vector.shape_cast %20 : vector<1x1x128xf32> to vector<1x128xf32>
    %22 = vector.broadcast %21 : vector<1x128xf32> to vector<8x128xf32>
    %23 = arith.addf %19, %22 : vector<8x128xf32>
    %cst_20 = arith.constant 0.000000e+00 : f32
    %24 = vector.broadcast %cst_20 : f32 to vector<8x128xf32>
    %25 = arith.maximumf %23, %24 : vector<8x128xf32>
    %c2 = arith.constant 2 : index
    %c0_21 = arith.constant 0 : index
    %c0_22 = arith.constant 0 : index
    %26 = vector.load %arg4[%c2, %c0_21, %c0_22] : memref<3x128x128xf32, #tpu.memory_space<vmem>>, vector<1x128x128xf32>
    %27 = vector.shape_cast %26 : vector<1x128x128xf32> to vector<128x128xf32>
    %cst_23 = arith.constant dense<0.000000e+00> : vector<8x128xf32>
    %28 = tpu.matmul %25, %27, %cst_23 {dimension_numbers = #tpu.dot_dimension_numbers<[1], [0], [0], [1], [0, 0, 1, 1], [], []>} : vector<8x128xf32>, vector<128x128xf32>, vector<8x128xf32> -> vector<8x128xf32>
    %c2_24 = arith.constant 2 : index
    %c0_25 = arith.constant 0 : index
    %c0_26 = arith.constant 0 : index
    %29 = vector.load %arg5[%c2_24, %c0_25, %c0_26] : memref<3x1x128xf32, #tpu.memory_space<vmem>>, vector<1x1x128xf32>
    %30 = vector.shape_cast %29 : vector<1x1x128xf32> to vector<1x128xf32>
    %31 = vector.broadcast %30 : vector<1x128xf32> to vector<8x128xf32>
    %32 = arith.addf %28, %31 : vector<8x128xf32>
    %cst_27 = arith.constant 0.000000e+00 : f32
    %33 = vector.broadcast %cst_27 : f32 to vector<8x128xf32>
    %34 = arith.maximumf %32, %33 : vector<8x128xf32>
    %c0_28 = arith.constant 0 : index
    %c0_29 = arith.constant 0 : index
    %35 = vector.load %arg6[%c0_28, %c0_29] : memref<128x128xf32, #tpu.memory_space<vmem>>, vector<128x128xf32>
    %cst_30 = arith.constant dense<0.000000e+00> : vector<8x128xf32>
    %36 = tpu.matmul %34, %35, %cst_30 {dimension_numbers = #tpu.dot_dimension_numbers<[1], [0], [0], [1], [0, 0, 1, 1], [], []>} : vector<8x128xf32>, vector<128x128xf32>, vector<8x128xf32> -> vector<8x128xf32>
    %c0_31 = arith.constant 0 : index
    %c0_32 = arith.constant 0 : index
    %37 = vector.load %arg7[%c0_31, %c0_32] : memref<1x128xf32, #tpu.memory_space<vmem>>, vector<1x128xf32>
    %38 = vector.broadcast %37 : vector<1x128xf32> to vector<8x128xf32>
    %39 = arith.addf %36, %38 : vector<8x128xf32>
    %40 = vector.extract_strided_slice %39 {offsets = [0, 0], sizes = [8, 1], strides = [1, 1]} : vector<8x128xf32> to vector<8x1xf32>
    %cst_33 = arith.constant 0.000000e+00 : f32
    %41 = vector.broadcast %cst_33 : f32 to vector<8x1xf32>
    %42 = arith.subf %41, %40 : vector<8x1xf32>
    %43 = math.exp %42 : vector<8x1xf32>
    %cst_34 = arith.constant 1.000000e+00 : f32
    %44 = vector.broadcast %cst_34 : f32 to vector<8x1xf32>
    %45 = arith.addf %44, %43 : vector<8x1xf32>
    %cst_35 = arith.constant 1.000000e+00 : f32
    %46 = vector.broadcast %cst_35 : f32 to vector<8x1xf32>
    %47 = arith.divf %46, %45 : vector<8x1xf32>
    %c0_36 = arith.constant 0 : index
    %c0_37 = arith.constant 0 : index
    %48 = vector.load %arg8[%c0_36, %c0_37] : memref<8x1xf32, #tpu.memory_space<vmem>>, vector<8x1xf32>
    tpu.vector_store %arg8[%c0_36, %c0_37], %47 {strides = array<i32>} : memref<8x1xf32, #tpu.memory_space<vmem>>, vector<8x1xf32>,
    return
  }
  func.func @transform_0(%arg0: i32) -> (i32, i32) {
    %c0_i32 = arith.constant 0 : i32
    %c0_i32_0 = arith.constant 0 : i32
    return %arg0, %c0_i32 : i32, i32
  }
  func.func @transform_1(%arg0: i32) -> (i32, i32) {
    %c0_i32 = arith.constant 0 : i32
    %c0_i32_0 = arith.constant 0 : i32
    %c0_i32_1 = arith.constant 0 : i32
    return %c0_i32, %c0_i32_0 : i32, i32
  }
  func.func @transform_2(%arg0: i32) -> (i32, i32) {
    %c0_i32 = arith.constant 0 : i32
    %c0_i32_0 = arith.constant 0 : i32
    %c0_i32_1 = arith.constant 0 : i32
    return %c0_i32, %c0_i32_0 : i32, i32
  }
  func.func @transform_3(%arg0: i32) -> (i32, i32, i32) {
    %c0_i32 = arith.constant 0 : i32
    %c0_i32_0 = arith.constant 0 : i32
    %c0_i32_1 = arith.constant 0 : i32
    %c0_i32_2 = arith.constant 0 : i32
    return %c0_i32, %c0_i32_0, %c0_i32_1 : i32, i32, i32
  }
  func.func @transform_4(%arg0: i32) -> (i32, i32, i32) {
    %c0_i32 = arith.constant 0 : i32
    %c0_i32_0 = arith.constant 0 : i32
    %c0_i32_1 = arith.constant 0 : i32
    %c0_i32_2 = arith.constant 0 : i32
    return %c0_i32, %c0_i32_0, %c0_i32_1 : i32, i32, i32
  }
  func.func @transform_5(%arg0: i32) -> (i32, i32) {
    %c0_i32 = arith.constant 0 : i32
    %c0_i32_0 = arith.constant 0 : i32
    %c0_i32_1 = arith.constant 0 : i32
    return %c0_i32, %c0_i32_0 : i32, i32
  }
  func.func @transform_6(%arg0: i32) -> (i32, i32) {
    %c0_i32 = arith.constant 0 : i32
    %c0_i32_0 = arith.constant 0 : i32
    %c0_i32_1 = arith.constant 0 : i32
    return %c0_i32, %c0_i32_0 : i32, i32
  }
  func.func @transform_7(%arg0: i32) -> (i32, i32) {
    %c0_i32 = arith.constant 0 : i32
    %c0_i32_0 = arith.constant 0 : i32
    return %arg0, %c0_i32 : i32, i32
  }
}

</mosaic_0001>

<llo_original>
// kernel: neural_network5_forward.1
$region0: #{neural_network5_forward.1}
  #allocation0 [shape = 'u32[]', space=smem, size = 0x4, offset = 0x4, fixed_abs, tag = 'smem constant byte address 0x4 - core index']
  #allocation1 [shape = 'u32[72,128]{1,0:T(1,128)}', space=vmem, size = 0x9000, scoped, tag = 'internal scratch']
  %s0 = inlined_call_operand.vmem [shape: f32[8,4], index: 0, kind: input, shape index: {}]
  %s1 = inlined_call_operand.vmem [shape: f32[4,128], index: 1, kind: input, shape index: {}]
  %s2 = inlined_call_operand.vmem [shape: f32[1,128], index: 2, kind: input, shape index: {}]
  %s3 = inlined_call_operand.vmem [shape: f32[3,128,128], index: 3, kind: input, shape index: {}]
  %s4 = inlined_call_operand.vmem [shape: f32[3,1,128], index: 4, kind: input, shape index: {}]
  %s5 = inlined_call_operand.vmem [shape: f32[128,128], index: 5, kind: input, shape index: {}]
  %s6 = inlined_call_operand.vmem [shape: f32[1,128], index: 6, kind: input, shape index: {}]
  %s7 = inlined_call_operand.vmem [shape: f32[8,1], index: 7, kind: output, shape index: {}]
  %s8 = sld [smem:[#allocation0]]
  $region38: #{neural_network5_forward.1} parent=0
    _
  %s10 = ssub.s32 1, %s8
  %s11 = scalar_select 0, %s10, %s8
  // Predicated region
  $region2: #{neural_network5_forward.1} parent=0 // pred_check
    _
  $region3: #{neural_network5_forward.1} parent=0 // pred_check_branch
    %13 = sbr.rel (0) target = $region5
  $region4: #{neural_network5_forward.1} parent=0 // pred_region
    _
  $region5: #{neural_network5_forward.1} parent=0 // pred_fallthru
    _
  // Predicated region
  $region6: #{neural_network5_forward.1} parent=0 // pred_check
    _
  $region7: #{neural_network5_forward.1} parent=0 // pred_check_branch
    %15 = sbr.rel (0) target = $region9
  $region8: #{neural_network5_forward.1} parent=0 // pred_region
    _
  $region9: #{neural_network5_forward.1} parent=0 // pred_fallthru
    _
  // Predicated region
  $region10: #{neural_network5_forward.1} parent=0 // pred_check
    _
  $region11: #{neural_network5_forward.1} parent=0 // pred_check_branch
    %17 = sbr.rel (0) target = $region13
  $region12: #{neural_network5_forward.1} parent=0 // pred_region
    _
  $region13: #{neural_network5_forward.1} parent=0 // pred_fallthru
    _
  // Predicated region
  $region14: #{neural_network5_forward.1} parent=0 // pred_check
    _
  $region15: #{neural_network5_forward.1} parent=0 // pred_check_branch
    %19 = sbr.rel (0) target = $region17
  $region16: #{neural_network5_forward.1} parent=0 // pred_region
    _
  $region17: #{neural_network5_forward.1} parent=0 // pred_fallthru
    _
  // Predicated region
  $region18: #{neural_network5_forward.1} parent=0 // pred_check
    _
  $region19: #{neural_network5_forward.1} parent=0 // pred_check_branch
    %21 = sbr.rel (0) target = $region21
  $region20: #{neural_network5_forward.1} parent=0 // pred_region
    _
  $region21: #{neural_network5_forward.1} parent=0 // pred_fallthru
    _
  // Predicated region
  $region22: #{neural_network5_forward.1} parent=0 // pred_check
    _
  $region23: #{neural_network5_forward.1} parent=0 // pred_check_branch
    %23 = sbr.rel (0) target = $region25
  $region24: #{neural_network5_forward.1} parent=0 // pred_region
    _
  $region25: #{neural_network5_forward.1} parent=0 // pred_fallthru
    _
  // Predicated region
  $region26: #{neural_network5_forward.1} parent=0 // pred_check
    _
  $region27: #{neural_network5_forward.1} parent=0 // pred_check_branch
    %25 = sbr.rel (0) target = $region29
  $region28: #{neural_network5_forward.1} parent=0 // pred_region
    _
  $region29: #{neural_network5_forward.1} parent=0 // pred_fallthru
    _
  %v26 = vld [vmem:[%s0] sm:$0xff]
  %v27 = vld [vmem:[%s1] sm:$0xf]
  %v28 = vld [vmem:[%s2] sm:$0x1]
  %v30 = vperm.slane %v28, 0
  %vm32 = vcmask 31744
  %v34 = vsel %vm32, %v26, 0
  %vm36 = vcmask 1043456
  %v38 = vsel %vm36, %v27, 0
  %40 = vmatpush.msra.mxu0 0.0
  %41 = vmatpush.msra.mxu0 0.0
  %42 = vmatpush.msra.mxu0 0.0
  %43 = vmatpush.msra.mxu0 0.0
  %44 = vmatpush.msra.mxu0 0.0
  %45 = vmatpush.msra.mxu0 0.0
  %46 = vmatpush.msra.mxu0 0.0
  %47 = vmatpush.msra.mxu0 0.0
  %48 = vmatpush.msra.mxu0 0.0
  %49 = vmatpush.msra.mxu0 0.0
  %50 = vmatpush.msra.mxu0 0.0
  %51 = vmatpush.msra.mxu0 0.0
  %52 = vmatpush.msra.mxu0 0.0
  %53 = vmatpush.msra.mxu0 0.0
  %54 = vmatpush.msra.mxu0 0.0
  %55 = vmatpush.msra.mxu0 %v38
  %56 = vmatmul.f32.gmra.mxu0 %v34
  %v57 = vpop.f32.mrf.mxu0
  %v58 = vadd.f32 %v30, %v57
  %59 = vdwg.mxu0
  %v60 = vmax.f32 %v58, 0.0
  %v61 = vld [vmem:[%s3] sm:$0xff]
  %v62 = vld [vmem:[%s3 + $0x8] sm:$0xff]
  %v63 = vld [vmem:[%s3 + $0x10] sm:$0xff]
  %v64 = vld [vmem:[%s3 + $0x18] sm:$0xff]
  %v65 = vld [vmem:[%s3 + $0x20] sm:$0xff]
  %v66 = vld [vmem:[%s3 + $0x28] sm:$0xff]
  %v67 = vld [vmem:[%s3 + $0x30] sm:$0xff]
  %v68 = vld [vmem:[%s3 + $0x38] sm:$0xff]
  %v69 = vld [vmem:[%s3 + $0x40] sm:$0xff]
  %v70 = vld [vmem:[%s3 + $0x48] sm:$0xff]
  %v71 = vld [vmem:[%s3 + $0x50] sm:$0xff]
  %v72 = vld [vmem:[%s3 + $0x58] sm:$0xff]
  %v73 = vld [vmem:[%s3 + $0x60] sm:$0xff]
  %v74 = vld [vmem:[%s3 + $0x68] sm:$0xff]
  %v75 = vld [vmem:[%s3 + $0x70] sm:$0xff]
  %v76 = vld [vmem:[%s3 + $0x78] sm:$0xff]
  %v77 = vld [vmem:[%s4] sm:$0x1]
  %v79 = vperm.slane %v77, 0
  %81 = vmatpush.msra.mxu0 %v76
  %82 = vmatpush.msra.mxu0 %v75
  %83 = vmatpush.msra.mxu0 %v74
  %84 = vmatpush.msra.mxu0 %v73
  %85 = vmatpush.msra.mxu0 %v72
  %86 = vmatpush.msra.mxu0 %v71
  %87 = vmatpush.msra.mxu0 %v70
  %88 = vmatpush.msra.mxu0 %v69
  %89 = vmatpush.msra.mxu0 %v68
  %90 = vmatpush.msra.mxu0 %v67
  %91 = vmatpush.msra.mxu0 %v66
  %92 = vmatpush.msra.mxu0 %v65
  %93 = vmatpush.msra.mxu0 %v64
  %94 = vmatpush.msra.mxu0 %v63
  %95 = vmatpush.msra.mxu0 %v62
  %96 = vmatpush.msra.mxu0 %v61
  %97 = vmatmul.f32.gmra.mxu0 %v60
  %v98 = vpop.f32.mrf.mxu0
  %v99 = vadd.f32 %v79, %v98
  %100 = vdwg.mxu0
  %v101 = vmax.f32 %v99, 0.0
  %s102 = scalar_lea.vmem %s3, 128
  %v103 = vld [vmem:[%s102] sm:$0xff]
  %v104 = vld [vmem:[%s102 + $0x8] sm:$0xff]
  %v105 = vld [vmem:[%s102 + $0x10] sm:$0xff]
  %v106 = vld [vmem:[%s102 + $0x18] sm:$0xff]
  %v107 = vld [vmem:[%s102 + $0x20] sm:$0xff]
  %v108 = vld [vmem:[%s102 + $0x28] sm:$0xff]
  %v109 = vld [vmem:[%s102 + $0x30] sm:$0xff]
  %v110 = vld [vmem:[%s102 + $0x38] sm:$0xff]
  %v111 = vld [vmem:[%s102 + $0x40] sm:$0xff]
  %v112 = vld [vmem:[%s102 + $0x48] sm:$0xff]
  %v113 = vld [vmem:[%s102 + $0x50] sm:$0xff]
  %v114 = vld [vmem:[%s102 + $0x58] sm:$0xff]
  %v115 = vld [vmem:[%s102 + $0x60] sm:$0xff]
  %v116 = vld [vmem:[%s102 + $0x68] sm:$0xff]
  %v117 = vld [vmem:[%s102 + $0x70] sm:$0xff]
  %v118 = vld [vmem:[%s102 + $0x78] sm:$0xff]
  %s119 = scalar_lea.vmem %s4, 1
  %v120 = vld [vmem:[%s119] sm:$0x1]
  %v122 = vperm.slane %v120, 0
  %124 = vmatpush.msra.mxu0 %v118
  %125 = vmatpush.msra.mxu0 %v117
  %126 = vmatpush.msra.mxu0 %v116
  %127 = vmatpush.msra.mxu0 %v115
  %128 = vmatpush.msra.mxu0 %v114
  %129 = vmatpush.msra.mxu0 %v113
  %130 = vmatpush.msra.mxu0 %v112
  %131 = vmatpush.msra.mxu0 %v111
  %132 = vmatpush.msra.mxu0 %v110
  %133 = vmatpush.msra.mxu0 %v109
  %134 = vmatpush.msra.mxu0 %v108
  %135 = vmatpush.msra.mxu0 %v107
  %136 = vmatpush.msra.mxu0 %v106
  %137 = vmatpush.msra.mxu0 %v105
  %138 = vmatpush.msra.mxu0 %v104
  %139 = vmatpush.msra.mxu0 %v103
  %140 = vmatmul.f32.gmra.mxu0 %v101
  %v141 = vpop.f32.mrf.mxu0
  %v142 = vadd.f32 %v122, %v141
  %143 = vdwg.mxu0
  %v144 = vmax.f32 %v142, 0.0
  %s145 = scalar_lea.vmem %s3, 256
  %v146 = vld [vmem:[%s145] sm:$0xff]
  %v147 = vld [vmem:[%s145 + $0x8] sm:$0xff]
  %v148 = vld [vmem:[%s145 + $0x10] sm:$0xff]
  %v149 = vld [vmem:[%s145 + $0x18] sm:$0xff]
  %v150 = vld [vmem:[%s145 + $0x20] sm:$0xff]
  %v151 = vld [vmem:[%s145 + $0x28] sm:$0xff]
  %v152 = vld [vmem:[%s145 + $0x30] sm:$0xff]
  %v153 = vld [vmem:[%s145 + $0x38] sm:$0xff]
  %v154 = vld [vmem:[%s145 + $0x40] sm:$0xff]
  %v155 = vld [vmem:[%s145 + $0x48] sm:$0xff]
  %v156 = vld [vmem:[%s145 + $0x50] sm:$0xff]
  %v157 = vld [vmem:[%s145 + $0x58] sm:$0xff]
  %v158 = vld [vmem:[%s145 + $0x60] sm:$0xff]
  %v159 = vld [vmem:[%s145 + $0x68] sm:$0xff]
  %v160 = vld [vmem:[%s145 + $0x70] sm:$0xff]
  %v161 = vld [vmem:[%s145 + $0x78] sm:$0xff]
  %s162 = scalar_lea.vmem %s4, 2
  %v163 = vld [vmem:[%s162] sm:$0x1]
  %v165 = vperm.slane %v163, 0
  %167 = vmatpush.msra.mxu0 %v161
  %168 = vmatpush.msra.mxu0 %v160
  %169 = vmatpush.msra.mxu0 %v159
  %170 = vmatpush.msra.mxu0 %v158
  %171 = vmatpush.msra.mxu0 %v157
  %172 = vmatpush.msra.mxu0 %v156
  %173 = vmatpush.msra.mxu0 %v155
  %174 = vmatpush.msra.mxu0 %v154
  %175 = vmatpush.msra.mxu0 %v153
  %176 = vmatpush.msra.mxu0 %v152
  %177 = vmatpush.msra.mxu0 %v151
  %178 = vmatpush.msra.mxu0 %v150
  %179 = vmatpush.msra.mxu0 %v149
  %180 = vmatpush.msra.mxu0 %v148
  %181 = vmatpush.msra.mxu0 %v147
  %182 = vmatpush.msra.mxu0 %v146
  %183 = vmatmul.f32.gmra.mxu0 %v144
  %v184 = vpop.f32.mrf.mxu0
  %v185 = vadd.f32 %v165, %v184
  %186 = vdwg.mxu0
  %v187 = vmax.f32 %v185, 0.0
  %v188 = vld [vmem:[%s5] sm:$0xff]
  %v189 = vld [vmem:[%s5 + $0x8] sm:$0xff]
  %v190 = vld [vmem:[%s5 + $0x10] sm:$0xff]
  %v191 = vld [vmem:[%s5 + $0x18] sm:$0xff]
  %v192 = vld [vmem:[%s5 + $0x20] sm:$0xff]
  %v193 = vld [vmem:[%s5 + $0x28] sm:$0xff]
  %v194 = vld [vmem:[%s5 + $0x30] sm:$0xff]
  %v195 = vld [vmem:[%s5 + $0x38] sm:$0xff]
  %v196 = vld [vmem:[%s5 + $0x40] sm:$0xff]
  %v197 = vld [vmem:[%s5 + $0x48] sm:$0xff]
  %v198 = vld [vmem:[%s5 + $0x50] sm:$0xff]
  %v199 = vld [vmem:[%s5 + $0x58] sm:$0xff]
  %v200 = vld [vmem:[%s5 + $0x60] sm:$0xff]
  %v201 = vld [vmem:[%s5 + $0x68] sm:$0xff]
  %v202 = vld [vmem:[%s5 + $0x70] sm:$0xff]
  %v203 = vld [vmem:[%s5 + $0x78] sm:$0xff]
  %v204 = vld [vmem:[%s6] sm:$0x1]
  %v206 = vperm.slane %v204, 0
  %208 = vmatpush.msra.mxu0 %v203
  %209 = vmatpush.msra.mxu0 %v202
  %210 = vmatpush.msra.mxu0 %v201
  %211 = vmatpush.msra.mxu0 %v200
  %212 = vmatpush.msra.mxu0 %v199
  %213 = vmatpush.msra.mxu0 %v198
  %214 = vmatpush.msra.mxu0 %v197
  %215 = vmatpush.msra.mxu0 %v196
  %216 = vmatpush.msra.mxu0 %v195
  %217 = vmatpush.msra.mxu0 %v194
  %218 = vmatpush.msra.mxu0 %v193
  %219 = vmatpush.msra.mxu0 %v192
  %220 = vmatpush.msra.mxu0 %v191
  %221 = vmatpush.msra.mxu0 %v190
  %222 = vmatpush.msra.mxu0 %v189
  %223 = vmatpush.msra.mxu0 %v188
  %224 = vmatmul.f32.gmra.mxu0 %v187
  %v225 = vpop.f32.mrf.mxu0
  %v226 = vadd.f32 %v206, %v225
  %227 = vdwg.mxu0
  %v228 = vsub.f32 0.0, %v226
  %v229 = vmul.f32 %v228, 1.442695
  %v230 = vpow.pop %v229
  %v231 = vadd.f32 %v230, 1.0
  %v232 = vrcp.pop %v231
  %v233 = vmul.f32 %v231, %v232
  %v234 = vsub.f32 1.0, %v233
  %v235 = vmul.f32 %v232, %v234
  %v236 = vadd.f32 %v232, %v235
  %vm237 = vweird.f32 %v231
  %vm238 = vweird.f32 %v232
  %vm239 = vmor %vm237, %vm238
  %v240 = vsel %vm239, %v232, %v236
  %v241 = vand.u32 2147483647, %v231
  %vm242 = vcmp.eq.f32.partialorder %v241, 8.507059e+37
  %v243 = vand.u32 %v231, 2147483648
  %v244 = vor.u32 1.1754944e-38, %v243
  %v245 = vsel %vm242, %v244, %v240
  %v246 = vmul.f32 1.0, %v245
  %vm247 = vcmask 7168
  %248 = vst.msk [vmem:[%s7] sm:$0xff] %vm247, %v246
  // Predicated region
  $region30: #{neural_network5_forward.1} parent=0 // pred_check
    _
  $region31: #{neural_network5_forward.1} parent=0 // pred_check_branch
    %250 = sbr.rel (0) target = $region33
  $region32: #{neural_network5_forward.1} parent=0 // pred_region
    _
  $region33: #{neural_network5_forward.1} parent=0 // pred_fallthru
    _
  // Predicated region
  $region34: #{neural_network5_forward.1} parent=0 // pred_check
    _
  $region35: #{neural_network5_forward.1} parent=0 // pred_check_branch
    %252 = sbr.rel (0) target = $region37
  $region36: #{neural_network5_forward.1} parent=0 // pred_region
    _
  $region37: #{neural_network5_forward.1} parent=0 // pred_fallthru
    _

</llo_original>
